<compile_context>
chip_gen: v7x
topology: tpu7x:2x2x1
jax: 0.10.0
libtpu: 0.0.40
codegen_flags: <defaults>
</compile_context>

<pallas_src>
import functools

import jax
import jax.numpy as jnp
from jax.experimental import pallas as pl
from jax.experimental.pallas import tpu as pltpu


def _leaky_relu(v, slope=0.1):
    return jnp.where(v > 0, v, slope * v)


def _round_up(n, m):
    return ((n + m - 1) // m) * m


# ----------------------------------------------------------------------------
# Kernel
# ----------------------------------------------------------------------------
def discriminator_kernel(xz_ref,            # [TILE_B, d_x+d_z]  bf16
                         w1_ref, b1_ref,    # [d_in, Hp] bf16 (block-diag), [1, Hp] f32
                         w2_ref, b2_ref,    # [Hp, Hp]  bf16,               [1, Hp] f32
                         w3_ref, b3_ref,    # [1, Hp]   f32 (final row),    [1, 1]  f32
                         out_ref):          # [TILE_B, 128] f32 (lane-dense)
    xz = xz_ref[...]                                            # bf16

    # Fused D_x / D_z branch: one block-diagonal matmul + bias + LeakyReLU.
    # (Dropout(0.2) is eval-mode identity.)
    h = jnp.dot(xz, w1_ref[...], preferred_element_type=jnp.float32) + b1_ref[...]
    h = _leaky_relu(h)                                          # f32, pad lanes stay 0

    # D_xz first Linear (+ Dropout identity + LeakyReLU).
    h = jnp.dot(h.astype(jnp.bfloat16), w2_ref[...],
                preferred_element_type=jnp.float32) + b2_ref[...]
    h = _leaky_relu(h)

    # Final Linear to 1 output: VPU multiply + XLU lane reduction instead of a
    # N=1 MXU matmul.  (Trailing Dropout is identity in eval mode.)
    res = jnp.sum(h * w3_ref[...], axis=-1, keepdims=True) + b3_ref[...]   # [TILE_B, 1]

    # Lane-dense store: broadcast across 128 lanes; wrapper slices column 0.
    out_ref[...] = jnp.broadcast_to(res, out_ref.shape).astype(out_ref.dtype)


# ----------------------------------------------------------------------------
# Parameter packing (block-diagonal fusion + 128-lane padding + bf16 cast)
# ----------------------------------------------------------------------------
def pack_params(p, d_x, d_z):
    h_x, h_z = 4 * d_x, 4 * d_z
    H = h_x + h_z
    Hp = _round_up(H, 128)
    d_in = d_x + d_z

    # Layer 1: block-diagonal [d_in, Hp] acting on concat(x, z).
    w1 = jnp.zeros((d_in, Hp), jnp.float32)
    w1 = w1.at[:d_x, :h_x].set(p["wx"])
    w1 = w1.at[d_x:, h_x:H].set(p["wz"])
    b1 = jnp.zeros((1, Hp), jnp.float32)
    b1 = b1.at[:, :h_x].set(p["bx"]).at[:, h_x:H].set(p["bz"])

    # Layer 2: zero-padded [Hp, Hp].
    w2 = jnp.zeros((Hp, Hp), jnp.float32).at[:H, :H].set(p["w1"])
    b2 = jnp.zeros((1, Hp), jnp.float32).at[:, :H].set(p["b1"])

    # Layer 3 (output dim 1): stored as a single row for the VPU reduce.
    w3 = jnp.zeros((1, Hp), jnp.float32).at[0, :H].set(p["w2"][:, 0])
    b3 = p["b2"].reshape(1, 1).astype(jnp.float32)

    return dict(w1=w1.astype(jnp.bfloat16), b1=b1,
                w2=w2.astype(jnp.bfloat16), b2=b2,
                w3=w3, b3=b3, d_in=d_in, Hp=Hp)


# ----------------------------------------------------------------------------
# Wrapper
# ----------------------------------------------------------------------------
@functools.partial(jax.jit, static_argnames=("tile_b",))
def discriminator_forward(x, z, params, *, tile_b=256):
    """x: [B, d_x], z: [B, d_z] -> [B, 1] (float32)."""
    B, d_x = x.shape
    d_z = z.shape[1]
    pk = pack_params(params, d_x, d_z)
    d_in, Hp = pk["d_in"], pk["Hp"]

    # Concat once in the wrapper; cast activations to bf16 (halves DMA bytes).
    xz = jnp.concatenate([x, z], axis=1).astype(jnp.bfloat16)

    # Batch tiling: multiples of 16 sublanes (bf16 packing); pad B to the tile.
    tile_b = min(tile_b, _round_up(B, 16))
    B_pad = _round_up(B, tile_b)
    if B_pad != B:
        xz = jnp.pad(xz, ((0, B_pad - B), (0, 0)))

    grid = (B_pad // tile_b,)
    const = lambda i: (0, 0)   # weights/biases: VMEM-resident across the grid

    out = pl.pallas_call(
        discriminator_kernel,
        out_shape=jax.ShapeDtypeStruct((B_pad, 128), jnp.float32),
        grid_spec=pltpu.PrefetchScalarGridSpec(
            num_scalar_prefetch=0,
            grid=grid,
            in_specs=[
                pl.BlockSpec((tile_b, d_in), lambda i: (i, 0)),   # xz tile
                pl.BlockSpec((d_in, Hp), const),                  # w1 (block-diag)
                pl.BlockSpec((1, Hp), const),                     # b1
                pl.BlockSpec((Hp, Hp), const),                    # w2
                pl.BlockSpec((1, Hp), const),                     # b2
                pl.BlockSpec((1, Hp), const),                     # w3 row
                pl.BlockSpec((1, 1), const),                      # b3
            ],
            out_specs=pl.BlockSpec((tile_b, 128), lambda i: (i, 0)),
        ),
        compiler_params=pltpu.CompilerParams(
            dimension_semantics=("parallel",),
        ),
    )(xz, pk["w1"], pk["b1"], pk["w2"], pk["b2"], pk["w3"], pk["b3"])

    return out[:B, :1]


# ----------------------------------------------------------------------------
# Params + pure-JAX reference (eval-mode dropout = identity)
# ----------------------------------------------------------------------------
def init_params(key, d_x, d_z):
    """Synthetic params matching nn.Linear shapes, stored transposed [in, out]."""
    h_x, h_z = 4 * d_x, 4 * d_z
    H = h_x + h_z
    keys = jax.random.split(key, 4)

    def lin(k, fan_in, fan_out):
        bound = 1.0 / jnp.sqrt(fan_in)
        kw, kb = jax.random.split(k)
        w = jax.random.uniform(kw, (fan_in, fan_out), jnp.float32, -bound, bound)
        b = jax.random.uniform(kb, (1, fan_out), jnp.float32, -bound, bound)
        return w, b

    wx, bx = lin(keys[0], d_x, h_x)
    wz, bz = lin(keys[1], d_z, h_z)
    w1, b1 = lin(keys[2], H, H)
    w2, b2 = lin(keys[3], H, 1)
    return {"wx": wx, "bx": bx, "wz": wz, "bz": bz,
            "w1": w1, "b1": b1, "w2": w2, "b2": b2}


def discriminator_ref(x, z, p):
    """Reference with the same bf16-MXU / f32-accumulate numerics as the kernel."""
    bf16, f32 = jnp.bfloat16, jnp.float32
    hx = _leaky_relu(jnp.dot(x.astype(bf16), p["wx"].astype(bf16),
                             preferred_element_type=f32) + p["bx"])
    hz = _leaky_relu(jnp.dot(z.astype(bf16), p["wz"].astype(bf16),
                             preferred_element_type=f32) + p["bz"])
    h = jnp.concatenate([hx, hz], axis=1)
    h = _leaky_relu(jnp.dot(h.astype(bf16), p["w1"].astype(bf16),
                            preferred_element_type=f32) + p["b1"])
    return jnp.dot(h, p["w2"]) + p["b2"]


if __name__ == "__main__":
    # TODO(synk): Dropout(0.2) layers are eval-mode identity (no stochastic
    # masking/scaling), so this kernel is inference-only.
    d_x, d_z, batch = 16, 8, 8

    key = jax.random.PRNGKey(0)
    kx, kz, kp = jax.random.split(key, 3)
    x = jax.random.normal(kx, (batch, d_x), jnp.float32)
    z = jax.random.normal(kz, (batch, d_z), jnp.float32)
    params = init_params(kp, d_x, d_z)

    out = discriminator_forward(x, z, params)
    out = jax.block_until_ready(out)

    ref = discriminator_ref(x, z, params)
    assert out.shape == (batch, 1), out.shape
    # bf16 MXU inputs in both kernel and reference -> only f32 accumulation-order
    # noise remains; keep a modest tolerance for safety.
    assert jnp.allclose(out, ref, atol=1e-2, rtol=1e-2), (out, ref)
    print("KERNEL_OK")
</pallas_src>

<mosaic_0001>
module attributes {stable_mosaic.version = 11 : i64} {
  func.func @discriminator_kernel(%arg0: i32, %arg1: memref<16x24xbf16, #tpu.memory_space<vmem>>, %arg2: memref<24x128xbf16, #tpu.memory_space<vmem>>, %arg3: memref<1x128xf32, #tpu.memory_space<vmem>>, %arg4: memref<128x128xbf16, #tpu.memory_space<vmem>>, %arg5: memref<1x128xf32, #tpu.memory_space<vmem>>, %arg6: memref<1x128xf32, #tpu.memory_space<vmem>>, %arg7: memref<1x1xf32, #tpu.memory_space<vmem>>, %arg8: memref<16x128xf32, #tpu.memory_space<vmem>>) attributes {dimension_semantics = [#tpu.dimension_semantics<parallel>], iteration_bounds = array<i64: 1>, scalar_prefetch = 0 : i64, scratch_operands = 0 : i64, tpu.core_type = #tpu.core_type<tc>, window_params = [{transform_indices = @transform_0, window_bounds = array<i64: 16, 24>}, {pipeline_mode = #tpu.pipeline_mode<synchronous>, transform_indices = @transform_1, window_bounds = array<i64: 24, 128>}, {pipeline_mode = #tpu.pipeline_mode<synchronous>, transform_indices = @transform_2, window_bounds = array<i64: 1, 128>}, {pipeline_mode = #tpu.pipeline_mode<synchronous>, transform_indices = @transform_3, window_bounds = array<i64: 128, 128>}, {pipeline_mode = #tpu.pipeline_mode<synchronous>, transform_indices = @transform_4, window_bounds = array<i64: 1, 128>}, {pipeline_mode = #tpu.pipeline_mode<synchronous>, transform_indices = @transform_5, window_bounds = array<i64: 1, 128>}, {pipeline_mode = #tpu.pipeline_mode<synchronous>, transform_indices = @transform_6, window_bounds = array<i64: 1, 1>}, {transform_indices = @transform_7, window_bounds = array<i64: 16, 128>}]} {
    %c0 = arith.constant 0 : index
    %c0_0 = arith.constant 0 : index
    %0 = vector.load %arg1[%c0, %c0_0] : memref<16x24xbf16, #tpu.memory_space<vmem>>, vector<16x24xbf16>
    %c0_1 = arith.constant 0 : index
    %c0_2 = arith.constant 0 : index
    %1 = vector.load %arg2[%c0_1, %c0_2] : memref<24x128xbf16, #tpu.memory_space<vmem>>, vector<24x128xbf16>
    %cst = arith.constant dense<0.000000e+00> : vector<16x128xf32>
    %2 = tpu.matmul %0, %1, %cst {dimension_numbers = #tpu.dot_dimension_numbers<[1], [0], [0], [1], [0, 0, 1, 1], [], []>} : vector<16x24xbf16>, vector<24x128xbf16>, vector<16x128xf32> -> vector<16x128xf32>
    %c0_3 = arith.constant 0 : index
    %c0_4 = arith.constant 0 : index
    %3 = vector.load %arg3[%c0_3, %c0_4] : memref<1x128xf32, #tpu.memory_space<vmem>>, vector<1x128xf32>
    %4 = vector.broadcast %3 : vector<1x128xf32> to vector<16x128xf32>
    %5 = arith.addf %2, %4 : vector<16x128xf32>
    %cst_5 = arith.constant 0.000000e+00 : f32
    %6 = vector.broadcast %cst_5 : f32 to vector<16x128xf32>
    %7 = arith.cmpf ogt, %5, %6 : vector<16x128xf32>
    %cst_6 = arith.constant 1.000000e-01 : f32
    %8 = vector.broadcast %cst_6 : f32 to vector<16x128xf32>
    %9 = arith.mulf %8, %5 : vector<16x128xf32>
    %10 = arith.select %7, %5, %9 : vector<16x128xi1>, vector<16x128xf32>
    %11 = arith.truncf %10 : vector<16x128xf32> to vector<16x128xbf16>
    %c0_7 = arith.constant 0 : index
    %c0_8 = arith.constant 0 : index
    %12 = vector.load %arg4[%c0_7, %c0_8] : memref<128x128xbf16, #tpu.memory_space<vmem>>, vector<128x128xbf16>
    %cst_9 = arith.constant dense<0.000000e+00> : vector<16x128xf32>
    %13 = tpu.matmul %11, %12, %cst_9 {dimension_numbers = #tpu.dot_dimension_numbers<[1], [0], [0], [1], [0, 0, 1, 1], [], []>} : vector<16x128xbf16>, vector<128x128xbf16>, vector<16x128xf32> -> vector<16x128xf32>
    %c0_10 = arith.constant 0 : index
    %c0_11 = arith.constant 0 : index
    %14 = vector.load %arg5[%c0_10, %c0_11] : memref<1x128xf32, #tpu.memory_space<vmem>>, vector<1x128xf32>
    %15 = vector.broadcast %14 : vector<1x128xf32> to vector<16x128xf32>
    %16 = arith.addf %13, %15 : vector<16x128xf32>
    %cst_12 = arith.constant 0.000000e+00 : f32
    %17 = vector.broadcast %cst_12 : f32 to vector<16x128xf32>
    %18 = arith.cmpf ogt, %16, %17 : vector<16x128xf32>
    %cst_13 = arith.constant 1.000000e-01 : f32
    %19 = vector.broadcast %cst_13 : f32 to vector<16x128xf32>
    %20 = arith.mulf %19, %16 : vector<16x128xf32>
    %21 = arith.select %18, %16, %20 : vector<16x128xi1>, vector<16x128xf32>
    %c0_14 = arith.constant 0 : index
    %c0_15 = arith.constant 0 : index
    %22 = vector.load %arg6[%c0_14, %c0_15] : memref<1x128xf32, #tpu.memory_space<vmem>>, vector<1x128xf32>
    %23 = vector.broadcast %22 : vector<1x128xf32> to vector<16x128xf32>
    %24 = arith.mulf %21, %23 : vector<16x128xf32>
    %cst_16 = arith.constant dense<0.000000e+00> : vector<16xf32>
    %25 = vector.multi_reduction <add>, %24, %cst_16 [1] : vector<16x128xf32> to vector<16xf32>
    %26 = vector.shape_cast %25 : vector<16xf32> to vector<16x1xf32>
    %c0_17 = arith.constant 0 : index
    %c0_18 = arith.constant 0 : index
    %27 = vector.load %arg7[%c0_17, %c0_18] : memref<1x1xf32, #tpu.memory_space<vmem>>, vector<1x1xf32>
    %28 = vector.broadcast %27 : vector<1x1xf32> to vector<16x1xf32>
    %29 = arith.addf %26, %28 : vector<16x1xf32>
    %30 = vector.shape_cast %29 : vector<16x1xf32> to vector<16x1xf32>
    %31 = vector.broadcast %30 : vector<16x1xf32> to vector<16x128xf32>
    %c0_19 = arith.constant 0 : index
    %c0_20 = arith.constant 0 : index
    %32 = vector.load %arg8[%c0_19, %c0_20] : memref<16x128xf32, #tpu.memory_space<vmem>>, vector<16x128xf32>
    tpu.vector_store %arg8[%c0_19, %c0_20], %31 {strides = array<i32>} : memref<16x128xf32, #tpu.memory_space<vmem>>, vector<16x128xf32>,
    return
  }
  func.func @transform_0(%arg0: i32) -> (i32, i32) {
    %c0_i32 = arith.constant 0 : i32
    %c0_i32_0 = arith.constant 0 : i32
    return %arg0, %c0_i32 : i32, i32
  }
  func.func @transform_1(%arg0: i32) -> (i32, i32) {
    %c0_i32 = arith.constant 0 : i32
    %c0_i32_0 = arith.constant 0 : i32
    %c0_i32_1 = arith.constant 0 : i32
    return %c0_i32, %c0_i32_0 : i32, i32
  }
  func.func @transform_2(%arg0: i32) -> (i32, i32) {
    %c0_i32 = arith.constant 0 : i32
    %c0_i32_0 = arith.constant 0 : i32
    %c0_i32_1 = arith.constant 0 : i32
    return %c0_i32, %c0_i32_0 : i32, i32
  }
  func.func @transform_3(%arg0: i32) -> (i32, i32) {
    %c0_i32 = arith.constant 0 : i32
    %c0_i32_0 = arith.constant 0 : i32
    %c0_i32_1 = arith.constant 0 : i32
    return %c0_i32, %c0_i32_0 : i32, i32
  }
  func.func @transform_4(%arg0: i32) -> (i32, i32) {
    %c0_i32 = arith.constant 0 : i32
    %c0_i32_0 = arith.constant 0 : i32
    %c0_i32_1 = arith.constant 0 : i32
    return %c0_i32, %c0_i32_0 : i32, i32
  }
  func.func @transform_5(%arg0: i32) -> (i32, i32) {
    %c0_i32 = arith.constant 0 : i32
    %c0_i32_0 = arith.constant 0 : i32
    %c0_i32_1 = arith.constant 0 : i32
    return %c0_i32, %c0_i32_0 : i32, i32
  }
  func.func @transform_6(%arg0: i32) -> (i32, i32) {
    %c0_i32 = arith.constant 0 : i32
    %c0_i32_0 = arith.constant 0 : i32
    %c0_i32_1 = arith.constant 0 : i32
    return %c0_i32, %c0_i32_0 : i32, i32
  }
  func.func @transform_7(%arg0: i32) -> (i32, i32) {
    %c0_i32 = arith.constant 0 : i32
    %c0_i32_0 = arith.constant 0 : i32
    return %arg0, %c0_i32 : i32, i32
  }
}

</mosaic_0001>

<llo_original>
// kernel: discriminator_forward.1
$region0: #{discriminator_forward.1}
  #allocation0 [shape = 'u32[]', space=smem, size = 0x4, offset = 0x4, fixed_abs, tag = 'smem constant byte address 0x4 - core index']
  #allocation1 [shape = 'u32[144,128]{1,0:T(1,128)}', space=vmem, size = 0x12000, scoped, tag = 'internal scratch']
  #allocation2 [shape = 'f32[1,1]{1,0:T(1,128)S(1)}', space=vmem, size = 0x200, scoped, tag = 'scoped memory for discriminator_forward.1']
  %s0 = inlined_call_operand.vmem [shape: bf16[16,24], index: 0, kind: input, shape index: {}]
  %s1 = inlined_call_operand.vmem [shape: bf16[24,128], index: 1, kind: input, shape index: {}]
  %s2 = inlined_call_operand.vmem [shape: f32[1,128], index: 2, kind: input, shape index: {}]
  %s3 = inlined_call_operand.vmem [shape: bf16[128,128], index: 3, kind: input, shape index: {}]
  %s4 = inlined_call_operand.vmem [shape: f32[1,128], index: 4, kind: input, shape index: {}]
  %s5 = inlined_call_operand.vmem [shape: f32[1,128], index: 5, kind: input, shape index: {}]
  %s6 = inlined_call_operand.<no memory space> [shape: f32[1,1], index: 6, kind: input, shape index: {}]
  %s7 = inlined_call_operand.vmem [shape: f32[16,128], index: 7, kind: output, shape index: {}]
  %s8 = sld [smem:[#allocation0]]
  $region38: #{discriminator_forward.1} parent=0
    _
  %s10 = ssub.s32 1, %s8
  %s11 = scalar_select 0, %s10, %s8
  %v12 = vstv %s6
  %13 = vst [vmem:[#allocation2] sm:$0x1] %v12
  // Predicated region
  $region2: #{discriminator_forward.1} parent=0 // pred_check
    _
  $region3: #{discriminator_forward.1} parent=0 // pred_check_branch
    %15 = sbr.rel (0) target = $region5
  $region4: #{discriminator_forward.1} parent=0 // pred_region
    _
  $region5: #{discriminator_forward.1} parent=0 // pred_fallthru
    _
  // Predicated region
  $region6: #{discriminator_forward.1} parent=0 // pred_check
    _
  $region7: #{discriminator_forward.1} parent=0 // pred_check_branch
    %17 = sbr.rel (0) target = $region9
  $region8: #{discriminator_forward.1} parent=0 // pred_region
    _
  $region9: #{discriminator_forward.1} parent=0 // pred_fallthru
    _
  // Predicated region
  $region10: #{discriminator_forward.1} parent=0 // pred_check
    _
  $region11: #{discriminator_forward.1} parent=0 // pred_check_branch
    %19 = sbr.rel (0) target = $region13
  $region12: #{discriminator_forward.1} parent=0 // pred_region
    _
  $region13: #{discriminator_forward.1} parent=0 // pred_fallthru
    _
  // Predicated region
  $region14: #{discriminator_forward.1} parent=0 // pred_check
    _
  $region15: #{discriminator_forward.1} parent=0 // pred_check_branch
    %21 = sbr.rel (0) target = $region17
  $region16: #{discriminator_forward.1} parent=0 // pred_region
    _
  $region17: #{discriminator_forward.1} parent=0 // pred_fallthru
    _
  // Predicated region
  $region18: #{discriminator_forward.1} parent=0 // pred_check
    _
  $region19: #{discriminator_forward.1} parent=0 // pred_check_branch
    %23 = sbr.rel (0) target = $region21
  $region20: #{discriminator_forward.1} parent=0 // pred_region
    _
  $region21: #{discriminator_forward.1} parent=0 // pred_fallthru
    _
  // Predicated region
  $region22: #{discriminator_forward.1} parent=0 // pred_check
    _
  $region23: #{discriminator_forward.1} parent=0 // pred_check_branch
    %25 = sbr.rel (0) target = $region25
  $region24: #{discriminator_forward.1} parent=0 // pred_region
    _
  $region25: #{discriminator_forward.1} parent=0 // pred_fallthru
    _
  // Predicated region
  $region26: #{discriminator_forward.1} parent=0 // pred_check
    _
  $region27: #{discriminator_forward.1} parent=0 // pred_check_branch
    %27 = sbr.rel (0) target = $region29
  $region28: #{discriminator_forward.1} parent=0 // pred_region
    _
  $region29: #{discriminator_forward.1} parent=0 // pred_fallthru
    _
  %v29 = vld [vmem:[%s0] sm:$0xf]
  %v30 = vld [vmem:[%s0 + $0x4] sm:$0xf]
  %v31 = vld [vmem:[%s1] sm:$0xf]
  %v32 = vld [vmem:[%s1 + $0x4] sm:$0xf]
  %v33 = vld [vmem:[%s1 + $0x8] sm:$0xf]
  %v34 = vld [vmem:[%s2] sm:$0x1]
  %v36 = vlaneseq
  %v37 = vshrl.u32 %v36, 7
  %v38 = vsub.s32 0, %v37
  %v39 = vrot.slane %v34, %v38
  %v43 = vunpack.c.l.b16 %v29
  %v44 = vunpack.c.l.b16 %v30
  %v45 = vpack.c.b16 %v44, %v43
  %v49 = vunpack.c.l.b16 %v31
  %v50 = vunpack.c.l.b16 %v32
  %v51 = vunpack.c.l.b16 %v33
  %v52 = vpack.c.b16 %v50, %v49
  %v53 = vpack.c.b16 %v51, %v51
  %vm55 = vcmask 195584
  %v57 = vsel %vm55, %v45, 0
  %vm59 = vcmask 1043456
  %v61 = vsel %vm59, %v53, 0
  %63 = vmatprep.subr.bf16.mxu0 0
  %64 = vmatpush1.bf16.msra.mxu0 %v52
  %65 = vmatprep.subr.bf16.mxu0 0
  %66 = vmatpush1.bf16.msra.mxu0 %v61
  %67 = vmatprep.subr.bf16.mxu0 0
  %68 = vmatpush1.bf16.msra.mxu0 0
  %69 = vmatprep.subr.bf16.mxu0 0
  %70 = vmatpush1.bf16.msra.mxu0 0
  %71 = vmatprep.subr.bf16.mxu0 0
  %72 = vmatpush1.bf16.msra.mxu0 0
  %73 = vmatprep.subr.bf16.mxu0 0
  %74 = vmatpush1.bf16.msra.mxu0 0
  %75 = vmatprep.subr.bf16.mxu0 0
  %76 = vmatpush1.bf16.msra.mxu0 0
  %77 = vmatprep.subr.bf16.mxu0 0
  %78 = vmatpush1.bf16.msra.mxu0 0
  %79 = vmatprep.subr.bf16.mxu0 0
  %80 = vmatpush1.bf16.msra.mxu0 0
  %81 = vmatprep.subr.bf16.mxu0 0
  %82 = vmatpush1.bf16.msra.mxu0 0
  %83 = vmatprep.subr.bf16.mxu0 0
  %84 = vmatpush1.bf16.msra.mxu0 0
  %85 = vmatprep.subr.bf16.mxu0 0
  %86 = vmatpush1.bf16.msra.mxu0 0
  %87 = vmatprep.subr.bf16.mxu0 0
  %88 = vmatpush1.bf16.msra.mxu0 0
  %89 = vmatprep.subr.bf16.mxu0 0
  %90 = vmatpush1.bf16.msra.mxu0 0
  %91 = vmatprep.subr.bf16.mxu0 0
  %92 = vmatpush1.bf16.msra.mxu0 0
  %93 = vmatprep.subr.bf16.mxu0 0
  %94 = vmatpush1.bf16.msra.mxu0 0
  %95 = vmatprep.mubr.bf16.mxu0 0
  %96 = vmatmul.mubr.bf16.gmra.mrb[0].mxu0 %v57
  %v97 = vpop.f32.mrb[0].mxu0
  %v98 = vadd.f32 %v39, %v97
  %v99 = vpop.f32.mrb[0].mxu0
  %v100 = vpop.f32.mrb[0].mxu0
  %v101 = vadd.f32 %v39, %v100
  %v102 = vpop.f32.mrb[0].mxu0
  %103 = vdwg.mxu0
  %vm104 = vcmp.gt.f32.partialorder %v98, 0.0
  %vm105 = vcmp.gt.f32.partialorder %v101, 0.0
  %v106 = vmul.f32 %v98, 0.1
  %v107 = vmul.f32 %v101, 0.1
  %v108 = vsel %vm104, %v98, %v106
  %v109 = vsel %vm105, %v101, %v107
  %v110 = vpack.c.bf16 %v109, %v108
  %v111 = vld [vmem:[%s3] sm:$0xf]
  %v112 = vld [vmem:[%s3 + $0x4] sm:$0xf]
  %v113 = vld [vmem:[%s3 + $0x8] sm:$0xf]
  %v114 = vld [vmem:[%s3 + $0xc] sm:$0xf]
  %v115 = vld [vmem:[%s3 + $0x10] sm:$0xf]
  %v116 = vld [vmem:[%s3 + $0x14] sm:$0xf]
  %v117 = vld [vmem:[%s3 + $0x18] sm:$0xf]
  %v118 = vld [vmem:[%s3 + $0x1c] sm:$0xf]
  %v119 = vld [vmem:[%s3 + $0x20] sm:$0xf]
  %v120 = vld [vmem:[%s3 + $0x24] sm:$0xf]
  %v121 = vld [vmem:[%s3 + $0x28] sm:$0xf]
  %v122 = vld [vmem:[%s3 + $0x2c] sm:$0xf]
  %v123 = vld [vmem:[%s3 + $0x30] sm:$0xf]
  %v124 = vld [vmem:[%s3 + $0x34] sm:$0xf]
  %v125 = vld [vmem:[%s3 + $0x38] sm:$0xf]
  %v126 = vld [vmem:[%s3 + $0x3c] sm:$0xf]
  %v127 = vld [vmem:[%s4] sm:$0x1]
  %v129 = vlaneseq
  %v130 = vshrl.u32 %v129, 7
  %v131 = vsub.s32 0, %v130
  %v132 = vrot.slane %v127, %v131
  %v150 = vunpack.c.l.b16 %v111
  %v151 = vunpack.c.l.b16 %v112
  %v152 = vunpack.c.l.b16 %v113
  %v153 = vunpack.c.l.b16 %v114
  %v154 = vunpack.c.l.b16 %v115
  %v155 = vunpack.c.l.b16 %v116
  %v156 = vunpack.c.l.b16 %v117
  %v157 = vunpack.c.l.b16 %v118
  %v158 = vunpack.c.l.b16 %v119
  %v159 = vunpack.c.l.b16 %v120
  %v160 = vunpack.c.l.b16 %v121
  %v161 = vunpack.c.l.b16 %v122
  %v162 = vunpack.c.l.b16 %v123
  %v163 = vunpack.c.l.b16 %v124
  %v164 = vunpack.c.l.b16 %v125
  %v165 = vunpack.c.l.b16 %v126
  %v166 = vpack.c.b16 %v151, %v150
  %v167 = vpack.c.b16 %v153, %v152
  %v168 = vpack.c.b16 %v155, %v154
  %v169 = vpack.c.b16 %v157, %v156
  %v170 = vpack.c.b16 %v159, %v158
  %v171 = vpack.c.b16 %v161, %v160
  %v172 = vpack.c.b16 %v163, %v162
  %v173 = vpack.c.b16 %v165, %v164
  %182 = vmatprep.subr.bf16.mxu0 0
  %183 = vmatpush1.bf16.msra.mxu0 %v166
  %184 = vmatprep.subr.bf16.mxu0 0
  %185 = vmatpush1.bf16.msra.mxu0 %v167
  %186 = vmatprep.subr.bf16.mxu0 0
  %187 = vmatpush1.bf16.msra.mxu0 %v168
  %188 = vmatprep.subr.bf16.mxu0 0
  %189 = vmatpush1.bf16.msra.mxu0 %v169
  %190 = vmatprep.subr.bf16.mxu0 0
  %191 = vmatpush1.bf16.msra.mxu0 %v170
  %192 = vmatprep.subr.bf16.mxu0 0
  %193 = vmatpush1.bf16.msra.mxu0 %v171
  %194 = vmatprep.subr.bf16.mxu0 0
  %195 = vmatpush1.bf16.msra.mxu0 %v172
  %196 = vmatprep.subr.bf16.mxu0 0
  %197 = vmatpush1.bf16.msra.mxu0 %v173
  %198 = vmatprep.subr.bf16.mxu0 0
  %199 = vmatpush1.bf16.msra.mxu0 0
  %200 = vmatprep.subr.bf16.mxu0 0
  %201 = vmatpush1.bf16.msra.mxu0 0
  %202 = vmatprep.subr.bf16.mxu0 0
  %203 = vmatpush1.bf16.msra.mxu0 0
  %204 = vmatprep.subr.bf16.mxu0 0
  %205 = vmatpush1.bf16.msra.mxu0 0
  %206 = vmatprep.subr.bf16.mxu0 0
  %207 = vmatpush1.bf16.msra.mxu0 0
  %208 = vmatprep.subr.bf16.mxu0 0
  %209 = vmatpush1.bf16.msra.mxu0 0
  %210 = vmatprep.subr.bf16.mxu0 0
  %211 = vmatpush1.bf16.msra.mxu0 0
  %212 = vmatprep.subr.bf16.mxu0 0
  %213 = vmatpush1.bf16.msra.mxu0 0
  %214 = vmatprep.mubr.bf16.mxu0 0
  %215 = vmatmul.mubr.bf16.gmra.mrb[0].mxu0 %v110
  %v216 = vpop.f32.mrb[0].mxu0
  %v217 = vadd.f32 %v132, %v216
  %v218 = vpop.f32.mrb[0].mxu0
  %v219 = vpop.f32.mrb[0].mxu0
  %v220 = vadd.f32 %v132, %v219
  %v221 = vpop.f32.mrb[0].mxu0
  %222 = vdwg.mxu0
  %vm223 = vcmp.gt.f32.partialorder %v217, 0.0
  %vm224 = vcmp.gt.f32.partialorder %v220, 0.0
  %v225 = vmul.f32 %v217, 0.1
  %v226 = vmul.f32 %v220, 0.1
  %v227 = vsel %vm223, %v217, %v225
  %v228 = vsel %vm224, %v220, %v226
  %v229 = vld [vmem:[%s5] sm:$0x1]
  %v231 = vlaneseq
  %v232 = vshrl.u32 %v231, 7
  %v233 = vsub.s32 0, %v232
  %v234 = vrot.slane %v229, %v233
  %v236 = vmul.f32 %v227, %v234
  %v237 = vmul.f32 %v228, %v234
  %238 = vadd.xlane.f32.xlu0 %v236
  %v239 = vpop.xlane.xlu0 %238
  %240 = vadd.xlane.f32.xlu0 %v237
  %v241 = vpop.xlane.xlu0 %240
  %v242 = vld [vmem:[#allocation2] sm:$0x1]
  %v244 = vlaneseq
  %v245 = vshrl.u32 %v244, 7
  %v246 = vsub.s32 0, %v245
  %v247 = vrot.slane %v242, %v246
  %v249 = vadd.f32 %v239, %v247
  %v250 = vadd.f32 %v241, %v247
  %252 = vset.pattern.permute.xlu0 0
  %253 = vperm.xlu0 %252, %v249
  %v254 = vpop.permute.xlu0 %253
  %257 = vset.pattern.permute.xlu0 0
  %258 = vperm.xlu0 %257, %v250
  %v259 = vpop.permute.xlu0 %258
  %261 = vst [vmem:[%s7] sm:$0xff] %v254
  %262 = vst [vmem:[%s7 + $0x8] sm:$0xff] %v259
  // Predicated region
  $region30: #{discriminator_forward.1} parent=0 // pred_check
    _
  $region31: #{discriminator_forward.1} parent=0 // pred_check_branch
    %264 = sbr.rel (0) target = $region33
  $region32: #{discriminator_forward.1} parent=0 // pred_region
    _
  $region33: #{discriminator_forward.1} parent=0 // pred_fallthru
    _
  // Predicated region
  $region34: #{discriminator_forward.1} parent=0 // pred_check
    _
  $region35: #{discriminator_forward.1} parent=0 // pred_check_branch
    %266 = sbr.rel (0) target = $region37
  $region36: #{discriminator_forward.1} parent=0 // pred_region
    _
  $region37: #{discriminator_forward.1} parent=0 // pred_fallthru
    _

</llo_original>
